<compile_context>
chip_gen: v6e
topology: v6e:2x2x1
jax: 0.10.0
libtpu: 0.0.40
codegen_flags: <defaults>
</compile_context>

<pallas_src>
import functools

import jax
import jax.numpy as jnp
from jax.experimental import pallas as pl
from jax.experimental.pallas import tpu as pltpu

NUM_TOKENS = 1000          # hard-coded in the PyTorch module
_N_PAD = 1024              # 1000 -> 1024: lane-dense output
_LANE = 128


def _round_up(x, m):
    return (x + m - 1) // m * m


def _plan_k(K, itemsize, tk_max, resident_w_bytes=24 * 1024 * 1024):
    """Decide the K tiling. Returns (tk, k_tiles, k_total).

    If the whole (k_pad, 1024) weight slab fits the VMEM budget even when
    double-buffered, keep it fully resident: the weight is DMA'd from HBM
    exactly once for the whole kernel and the K grid axis collapses to 1.
    """
    k_pad = _round_up(K, _LANE)
    if 2 * k_pad * _N_PAD * itemsize <= resident_w_bytes:
        tk = k_pad
    else:
        tk = min(_round_up(tk_max, _LANE), k_pad)
    k_tiles = pl.cdiv(k_pad, tk)
    return tk, k_tiles, k_tiles * tk


def prepare_mapping_params(weight, bias, *, compute_dtype=jnp.bfloat16, tk_max=2048):
    """One-time parameter prep (call at setup, NOT per forward step).

    - transposes W to the MXU-natural (K, N) orientation,
    - casts to the compute dtype,
    - zero-pads K to the tile boundary and N to 1024 (lane-dense).
    Doing this once removes a full extra HBM read+write of W from every call.
    """
    N, K = weight.shape
    assert N == NUM_TOKENS, f"expected {NUM_TOKENS}-row weight, got {N}"
    cdt = jnp.dtype(compute_dtype)
    _, _, k_total = _plan_k(K, cdt.itemsize, tk_max)
    w_p = jnp.pad(weight.T.astype(cdt), ((0, k_total - K), (0, _N_PAD - N)))
    b_p = jnp.pad(bias.astype(jnp.float32), (0, _N_PAD - N)).reshape(1, _N_PAD)
    return w_p, b_p


def _mapping_kernel(x_ref, w_ref, b_ref, o_ref):
    """(tm, tk) @ (tk, tn) partial product, accumulated into the resident f32
    output block.  Bias is folded into the k == 0 write, so the first K step
    has no separate init + read-modify-write pass."""
    k = pl.program_id(2)
    part = jnp.dot(x_ref[...], w_ref[...], preferred_element_type=jnp.float32)

    @pl.when(k == 0)
    def _():
        o_ref[...] = b_ref[...] + part          # (1, tn) bias broadcasts over tm

    @pl.when(k > 0)
    def _():
        o_ref[...] += part


@functools.partial(jax.jit, static_argnames=("tk_max", "tm_max"))
def mapping_layer_forward(word_embeddings, w_prepped, b_prepped, *,
                          tk_max=2048, tm_max=512):
    """y = word_embeddings.float() @ W.T + b

    word_embeddings: (..., vocab_size)   any float dtype
    w_prepped:       (k_total, 1024)     from prepare_mapping_params (K, N layout)
    b_prepped:       (1, 1024)           from prepare_mapping_params
    returns:         (..., 1000)         float32
    """
    *lead, K = word_embeddings.shape
    cdt = w_prepped.dtype
    itemsize = jnp.dtype(cdt).itemsize

    tk, k_tiles, k_total = _plan_k(K, itemsize, tk_max)
    assert w_prepped.shape == (k_total, _N_PAD), (
        "weight must be prepared via prepare_mapping_params with the same "
        f"compute dtype / tk_max; got {w_prepped.shape}, expected {(k_total, _N_PAD)}")
    assert b_prepped.shape == (1, _N_PAD)

    x2d = word_embeddings.reshape(-1, K).astype(cdt)
    M = x2d.shape[0]

    # bf16 operands pack (16, 128) per vreg -> round tm to 16; f32 -> 8.
    sub = 16 if itemsize < 4 else 8
    tm = min(tm_max, _round_up(M, sub))
    tm = max(sub, (tm // sub) * sub)
    m_pad = _round_up(M, tm)
    m_tiles = m_pad // tm

    # Small-M (decode-like) shapes: split N into two 512-lane parallel halves so
    # v7x's second TensorCore gets work (no effect on single-core v5e/v6e).
    tn = _N_PAD if m_tiles > 1 else _N_PAD // 2
    n_tiles = _N_PAD // tn

    # Pad the activations only when strictly necessary (avoids an extra HBM
    # read+write of x on the common aligned path).
    if m_pad != M or k_total != K:
        x_p = jnp.pad(x2d, ((0, m_pad - M), (0, k_total - K)))
    else:
        x_p = x2d

    # VMEM cap: double-buffered footprint, kept <= ~48 MiB so it is safe on
    # v7x's 64 MiB while still allowing large tiles on v5e/v6e.
    footprint = (2 * (tm * tk + tk * tn) * itemsize
                 + 2 * tm * tn * 4 + 2 * _N_PAD * 4)
    vmem_limit = max(32 * 1024 * 1024,
                     min(48 * 1024 * 1024, footprint + 8 * 1024 * 1024))
    vmem_limit = max(vmem_limit, footprint + 2 * 1024 * 1024)

    w_hbm_reads = 1 if k_tiles == 1 else m_tiles   # resident W is read once total
    cost = pl.CostEstimate(
        flops=2 * M * K * NUM_TOKENS,
        transcendentals=0,
        bytes_accessed=(M * k_total * itemsize
                        + w_hbm_reads * k_total * _N_PAD * itemsize
                        + _N_PAD * 4
                        + m_pad * _N_PAD * 4),
    )

    out = pl.pallas_call(
        _mapping_kernel,
        out_shape=jax.ShapeDtypeStruct((m_pad, _N_PAD), jnp.float32),
        grid_spec=pltpu.PrefetchScalarGridSpec(
            num_scalar_prefetch=0,
            grid=(m_tiles, n_tiles, k_tiles),
            in_specs=[
                pl.BlockSpec((tm, tk), lambda i, j, k: (i, k)),    # x tile
                pl.BlockSpec((tk, tn), lambda i, j, k: (k, j)),    # W tile, (K, N) layout
                pl.BlockSpec((1, tn), lambda i, j, k: (0, j)),     # bias slice
            ],
            out_specs=pl.BlockSpec((tm, tn), lambda i, j, k: (i, j)),
        ),
        compiler_params=pltpu.CompilerParams(
            dimension_semantics=("parallel", "parallel", "arbitrary"),
            vmem_limit_bytes=int(vmem_limit),
        ),
        cost_estimate=cost,
    )(x_p, w_prepped, b_prepped)

    out = out[:M, :NUM_TOKENS]
    return out.reshape(*lead, NUM_TOKENS)


def init_mapping_layer_params(key, vocab_size, num_tokens=NUM_TOKENS):
    """Deterministic init matching nn.Linear's default (uniform +-1/sqrt(fan_in))."""
    kw, kb = jax.random.split(key)
    bound = 1.0 / (vocab_size ** 0.5)
    weight = jax.random.uniform(
        kw, (num_tokens, vocab_size), jnp.float32, -bound, bound)
    bias = jax.random.uniform(kb, (num_tokens,), jnp.float32, -bound, bound)
    return weight, bias


if __name__ == "__main__":
    key = jax.random.PRNGKey(0)
    k_x, k_p = jax.random.split(key)

    vocab_size = 256
    batch, seq = 2, 8
    # word_embeddings in bf16 to exercise the `.to(torch.float32)` semantics.
    x = jax.random.normal(k_x, (batch, seq, vocab_size), dtype=jnp.bfloat16)

    weight, bias = init_mapping_layer_params(k_p, vocab_size)

    # Pure-JAX f32 reference of the original module's forward.
    ref = x.astype(jnp.float32) @ weight.T + bias

    # Fast path (default): weights prepared ONCE (bf16, transposed, padded);
    # bf16 MXU operands, f32 accumulation.
    w_bf16, b_pad = prepare_mapping_params(weight, bias, compute_dtype=jnp.bfloat16)
    out_fast = jax.block_until_ready(mapping_layer_forward(x, w_bf16, b_pad))
    assert out_fast.shape == (batch, seq, NUM_TOKENS)
    assert out_fast.dtype == jnp.float32
    assert jnp.allclose(out_fast, ref, atol=3e-2, rtol=3e-2)

    # Bit-faithful path: f32 operands, matches x.float() @ W.T + b tightly.
    w_f32, b_pad32 = prepare_mapping_params(weight, bias, compute_dtype=jnp.float32)
    out_f32 = jax.block_until_ready(mapping_layer_forward(x, w_f32, b_pad32))
    assert out_f32.shape == (batch, seq, NUM_TOKENS)
    assert jnp.allclose(out_f32, ref, atol=1e-4, rtol=1e-4)

    print("KERNEL_OK")
</pallas_src>

<mosaic_0001>
module attributes {stable_mosaic.version = 11 : i64} {
  func.func @_mapping_kernel(%arg0: i32, %arg1: i32, %arg2: i32, %arg3: memref<16x256xbf16, #tpu.memory_space<vmem>>, %arg4: memref<256x512xbf16, #tpu.memory_space<vmem>>, %arg5: memref<1x512xf32, #tpu.memory_space<vmem>>, %arg6: memref<16x512xf32, #tpu.memory_space<vmem>>) attributes {dimension_semantics = [#tpu.dimension_semantics<parallel>, #tpu.dimension_semantics<parallel>, #tpu.dimension_semantics<arbitrary>], iteration_bounds = array<i64: 1, 2, 1>, scalar_prefetch = 0 : i64, scratch_operands = 0 : i64, tpu.core_type = #tpu.core_type<tc>, window_params = [{transform_indices = @transform_0, window_bounds = array<i64: 16, 256>}, {transform_indices = @transform_1, window_bounds = array<i64: 256, 512>}, {transform_indices = @transform_2, window_bounds = array<i64: 1, 512>}, {transform_indices = @transform_3, window_bounds = array<i64: 16, 512>}]} {
    %c0 = arith.constant 0 : index
    %c0_0 = arith.constant 0 : index
    %0 = vector.load %arg3[%c0, %c0_0] : memref<16x256xbf16, #tpu.memory_space<vmem>>, vector<16x256xbf16>
    %c0_1 = arith.constant 0 : index
    %c0_2 = arith.constant 0 : index
    %1 = vector.load %arg4[%c0_1, %c0_2] : memref<256x512xbf16, #tpu.memory_space<vmem>>, vector<256x512xbf16>
    %cst = arith.constant dense<0.000000e+00> : vector<16x512xf32>
    %2 = tpu.matmul %0, %1, %cst {dimension_numbers = #tpu.dot_dimension_numbers<[1], [0], [0], [1], [0, 0, 1, 1], [], []>} : vector<16x256xbf16>, vector<256x512xbf16>, vector<16x512xf32> -> vector<16x512xf32>
    %c0_i32 = arith.constant 0 : i32
    %3 = arith.cmpi eq, %arg2, %c0_i32 : i32
    %4 = arith.extui %3 : i1 to i32
    %c0_i32_3 = arith.constant 0 : i32
    %5 = arith.cmpi ne, %4, %c0_i32_3 : i32
    scf.if %5 {
      %c0_6 = arith.constant 0 : index
      %c0_7 = arith.constant 0 : index
      %9 = vector.load %arg5[%c0_6, %c0_7] : memref<1x512xf32, #tpu.memory_space<vmem>>, vector<1x512xf32>
      %10 = vector.broadcast %9 : vector<1x512xf32> to vector<16x512xf32>
      %11 = arith.addf %10, %2 : vector<16x512xf32>
      %c0_8 = arith.constant 0 : index
      %c0_9 = arith.constant 0 : index
      %12 = vector.load %arg6[%c0_8, %c0_9] : memref<16x512xf32, #tpu.memory_space<vmem>>, vector<16x512xf32>
      tpu.vector_store %arg6[%c0_8, %c0_9], %11 {strides = array<i32>} : memref<16x512xf32, #tpu.memory_space<vmem>>, vector<16x512xf32>,
    } else {
    }
    %c0_i32_4 = arith.constant 0 : i32
    %6 = arith.cmpi sgt, %arg2, %c0_i32_4 : i32
    %7 = arith.extui %6 : i1 to i32
    %c0_i32_5 = arith.constant 0 : i32
    %8 = arith.cmpi ne, %7, %c0_i32_5 : i32
    scf.if %8 {
      %c0_6 = arith.constant 0 : index
      %c0_7 = arith.constant 0 : index
      %9 = vector.load %arg6[%c0_6, %c0_7] : memref<16x512xf32, #tpu.memory_space<vmem>>, vector<16x512xf32>
      %10 = arith.addf %9, %2 : vector<16x512xf32>
      %c0_8 = arith.constant 0 : index
      %c0_9 = arith.constant 0 : index
      %11 = vector.load %arg6[%c0_8, %c0_9] : memref<16x512xf32, #tpu.memory_space<vmem>>, vector<16x512xf32>
      tpu.vector_store %arg6[%c0_8, %c0_9], %10 {strides = array<i32>} : memref<16x512xf32, #tpu.memory_space<vmem>>, vector<16x512xf32>,
    } else {
    }
    return
  }
  func.func @transform_0(%arg0: i32, %arg1: i32, %arg2: i32) -> (i32, i32) {
    %c0_i32 = arith.constant 0 : i32
    return %arg0, %arg2 : i32, i32
  }
  func.func @transform_1(%arg0: i32, %arg1: i32, %arg2: i32) -> (i32, i32) {
    %c0_i32 = arith.constant 0 : i32
    return %arg2, %arg1 : i32, i32
  }
  func.func @transform_2(%arg0: i32, %arg1: i32, %arg2: i32) -> (i32, i32) {
    %c0_i32 = arith.constant 0 : i32
    %c0_i32_0 = arith.constant 0 : i32
    return %c0_i32, %arg1 : i32, i32
  }
  func.func @transform_3(%arg0: i32, %arg1: i32, %arg2: i32) -> (i32, i32) {
    %c0_i32 = arith.constant 0 : i32
    return %arg0, %arg1 : i32, i32
  }
}

</mosaic_0001>

<llo_original>
// kernel: mapping_layer_forward.1
$region0: #{mapping_layer_forward.1}
  #allocation0 [shape = 'u32[]', space=smem, size = 0x4, offset = 0x4, fixed_abs, tag = 'smem constant byte address 0x4 - core index']
  #allocation1 [shape = 'u32[144,128]{1,0:T(1,128)}', space=vmem, size = 0x12000, scoped, tag = 'internal scratch']
  %s0 = inlined_call_operand.hbm [shape: bf16[16,256], index: 0, kind: input, shape index: {}]
  %s1 = inlined_call_operand.hbm [shape: bf16[256,1024], index: 1, kind: input, shape index: {}]
  %s2 = inlined_call_operand.hbm [shape: f32[1,1024], index: 2, kind: input, shape index: {}]
  %s3 = inlined_call_operand.vmem [shape: f32[16,1024], index: 3, kind: output, shape index: {}]
  %s4 = sld [smem:[#allocation0]]
  $region84: #{mapping_layer_forward.1} parent=0
    _
  %s6 = ssub.s32 1, %s4
  %s7 = scalar_select 0, %s6, %s4
  $region1: #{mapping_layer_forward.1} parent=0
    #allocation2 [shape = 'u8[8192]{0}', space=vmem, size = 0x2000, scoped, tag = 'input window, operand 0, single buffered']
    #allocation3 [shape = 's32[2]{0}', space=sflag, size = 0x8, scoped, tag = 'scoped memory for mapping_layer_forward.1']
    #allocation4 [shape = 'u8[524288]{0}', space=vmem, size = 0x80000, scoped, tag = 'input window, operand 1']
    #allocation5 [shape = 's32[2]{0}', space=sflag, size = 0x8, scoped, tag = 'scoped memory for mapping_layer_forward.1']
    #allocation6 [shape = 'u8[4096]{0}', space=vmem, size = 0x1000, scoped, tag = 'input window, operand 2']
    #allocation7 [shape = 'u8[65536]{0}', space=vmem, size = 0x10000, scoped, tag = 'output window, operand 0']
    %8 = vsyncpa [#allocation3], 0
    %9 = vsyncpa [#allocation5], 0
    %s10 = scalar_lea.sflag [#allocation5], 1
    %11 = vsyncpa %s10, 0
    loop: start=0, step=1, limit=4
    $region2: #{mapping_layer_forward.1} parent=1 // loop_pre_header
      _
    $region3: #{mapping_layer_forward.1} parent=1 // loop_header
      %s13 = sphi 0, %s17
      %p14 = scmp.ge.s32.totalorder %s13, 4
      %s20 = sphi 0, %s39
      %s21 = sphi 0, %s35
      %s22 = sphi 0, %s31
      %s23 = sphi 0, %s20
      %s24 = sphi 0, %s21
      %s25 = sphi 0, %s22
      %s26 = sphi 0, %s23
      %s27 = sphi 0, %s24
      %s28 = sphi 0, %s25
      %s44 = sphi 0, %s46
      %s47 = sphi 0, %s44
      %s48 = sphi 0, %s47
      %s64 = sphi 0, %s48
      %s72 = sphi 0, %s74
      %s75 = sphi 0, %s72
      %s76 = sphi 0, %s75
      %s92 = sphi 0, %s76
      %s98 = sphi 0, %s100
      %s101 = sphi 0, %s98
      %s102 = sphi 0, %s101
      %s118 = sphi 0, %s102
      %s126 = sphi 0, %s128
      %s129 = sphi 0, %s126
      %s130 = sphi 0, %s129
      %s146 = sphi 0, %s130
    $region4: #{mapping_layer_forward.1} parent=1 // loop_header_branch
      %16 = sbr.rel (%p14) target = $region8
    $region5: #{mapping_layer_forward.1} parent=1 // loop_body
      %s18 = ssub.s32 %s13, 1
      %s19 = ssub.s32 %s13, 2
      %s29 = sadd.s32 1, %s22
      %p30 = scmp.ge.s32.totalorder %s29, 1
      %s31 = scalar_select %p30, 0, %s29
      %s32 = sadd.s32 1, %s21
      %s33 = scalar_select %p30, %s32, %s21
      %p34 = scmp.ge.s32.totalorder %s33, 2
      %s35 = scalar_select %p34, 0, %s33
      %s36 = sadd.s32 1, %s20
      %s37 = scalar_select %p34, %s36, %s20
      %p38 = scmp.ge.s32.totalorder %s37, 1
      %s39 = scalar_select %p38, 0, %s37
      %s40 = ssub.s32 %s20, %s39
      %s41 = ssub.s32 %s22, %s31
      %s42 = sor.u32 %s40, %s41
      %p43 = scmp.eq.s32.totalorder %s42, 0
      %s45 = sadd.s32 %s44, 1
      %s46 = scalar_select %p43, %s44, %s45
      %p49 = pneg %p43
      %p50 = scmp.eq.s32.totalorder %s13, 1
      %p51 = por %p49, %p50
      %p52 = scmp.ne.s32.totalorder %s44, %s47
      %p53 = scmp.eq.s32.totalorder %s13, 0
      %p54 = por %p52, %p53
      %p55 = scmp.ne.s32.totalorder %s44, %s47
      %p56 = scmp.eq.s32.totalorder %s18, 1
      %p57 = por %p55, %p56
      %p58 = scmp.ne.s32.totalorder %s47, %s48
      %p59 = scmp.eq.s32.totalorder %s18, 0
      %p60 = por %p58, %p59
      %p61 = scmp.ne.s32.totalorder %s47, %s48
      %p62 = scmp.eq.s32.totalorder %s19, 1
      %p63 = por %p61, %p62
      %p65 = scmp.ne.s32.totalorder %s48, %s64
      %p66 = scmp.eq.s32.totalorder %s19, 0
      %p67 = por %p65, %p66
      %s68 = ssub.s32 %s22, %s31
      %s69 = ssub.s32 %s21, %s35
      %s70 = sor.u32 %s68, %s69
      %p71 = scmp.eq.s32.totalorder %s70, 0
      %s73 = sadd.s32 %s72, 1
      %s74 = scalar_select %p71, %s72, %s73
      %p77 = pneg %p71
      %p78 = scmp.eq.s32.totalorder %s13, 1
      %p79 = por %p77, %p78
      %p80 = scmp.ne.s32.totalorder %s72, %s75
      %p81 = scmp.eq.s32.totalorder %s13, 0
      %p82 = por %p80, %p81
      %p83 = scmp.ne.s32.totalorder %s72, %s75
      %p84 = scmp.eq.s32.totalorder %s18, 1
      %p85 = por %p83, %p84
      %p86 = scmp.ne.s32.totalorder %s75, %s76
      %p87 = scmp.eq.s32.totalorder %s18, 0
      %p88 = por %p86, %p87
      %p89 = scmp.ne.s32.totalorder %s75, %s76
      %p90 = scmp.eq.s32.totalorder %s19, 1
      %p91 = por %p89, %p90
      %p93 = scmp.ne.s32.totalorder %s76, %s92
      %p94 = scmp.eq.s32.totalorder %s19, 0
      %p95 = por %p93, %p94
      %s96 = ssub.s32 %s21, %s35
      %p97 = scmp.eq.s32.totalorder %s96, 0
      %s99 = sadd.s32 %s98, 1
      %s100 = scalar_select %p97, %s98, %s99
      %p103 = pneg %p97
      %p104 = scmp.eq.s32.totalorder %s13, 1
      %p105 = por %p103, %p104
      %p106 = scmp.ne.s32.totalorder %s98, %s101
      %p107 = scmp.eq.s32.totalorder %s13, 0
      %p108 = por %p106, %p107
      %p109 = scmp.ne.s32.totalorder %s98, %s101
      %p110 = scmp.eq.s32.totalorder %s18, 1
      %p111 = por %p109, %p110
      %p112 = scmp.ne.s32.totalorder %s101, %s102
      %p113 = scmp.eq.s32.totalorder %s18, 0
      %p114 = por %p112, %p113
      %p115 = scmp.ne.s32.totalorder %s101, %s102
      %p116 = scmp.eq.s32.totalorder %s19, 1
      %p117 = por %p115, %p116
      %p119 = scmp.ne.s32.totalorder %s102, %s118
      %p120 = scmp.eq.s32.totalorder %s19, 0
      %p121 = por %p119, %p120
      %s122 = ssub.s32 %s20, %s39
      %s123 = ssub.s32 %s21, %s35
      %s124 = sor.u32 %s122, %s123
      %p125 = scmp.eq.s32.totalorder %s124, 0
      %s127 = sadd.s32 %s126, 1
      %s128 = scalar_select %p125, %s126, %s127
      %p131 = pneg %p125
      %p132 = scmp.eq.s32.totalorder %s13, 1
      %p133 = por %p131, %p132
      %p134 = scmp.ne.s32.totalorder %s126, %s129
      %p135 = scmp.eq.s32.totalorder %s13, 0
      %p136 = por %p134, %p135
      %p137 = scmp.ne.s32.totalorder %s126, %s129
      %p138 = scmp.eq.s32.totalorder %s18, 1
      %p139 = por %p137, %p138
      %p140 = scmp.ne.s32.totalorder %s129, %s130
      %p141 = scmp.eq.s32.totalorder %s18, 0
      %p142 = por %p140, %p141
      %p143 = scmp.ne.s32.totalorder %s129, %s130
      %p144 = scmp.eq.s32.totalorder %s19, 1
      %p145 = por %p143, %p144
      %p147 = scmp.ne.s32.totalorder %s130, %s146
      %p148 = scmp.eq.s32.totalorder %s19, 0
      %p149 = por %p147, %p148
      %p150 = scmp.le.s32.totalorder 1, %s13
      %p151 = scmp.lt.s32.totalorder %s13, 3
      %p152 = pnand %p150, %p151
      %p153 = pneg %p152
      // Predicated region
      $region9: #{mapping_layer_forward.1} parent=5 // pred_check
        _
      $region10: #{mapping_layer_forward.1} parent=5 // pred_check_branch
        %155 = sbr.rel (%p152) target = $region12
      $region11: #{mapping_layer_forward.1} parent=5 // pred_region
        %s156 = ssub.s32 %s13, 1
        // Predicated region
        $region13: #{mapping_layer_forward.1} parent=11 // pred_check
          %p157 = pneg %p60
        $region14: #{mapping_layer_forward.1} parent=11 // pred_check_branch
          %159 = sbr.rel (%p157) target = $region16
        $region15: #{mapping_layer_forward.1} parent=11 // pred_region
          %s160 = smul.u32 2, %s23
          %s161 = smul.u32 2, %s25
          %s163 = ssub.s32 256, 256
          %164 = vsyncadd [#allocation3], %s163
          %s165 = smul.addr %s160, 2
          %s166 = sadd.s32 %s161, %s165
          %s167 = smul.addr %s166, 64
          %s168 = scalar_lea.hbm %s0, %s167
          %s169 = sshll.u32 [#allocation2], 4
          %s170 = int_to_ptr.vmem [resolvable:$true] %s169
          %175 = dma.hbm_to_vmem [thread:$0]  %s168, 256, %s170, [#allocation3], 128, 128, 8
        $region16: #{mapping_layer_forward.1} parent=11 // pred_fallthru
          _
      $region12: #{mapping_layer_forward.1} parent=5 // pred_fallthru
        _
      %p176 = scmp.lt.s32.totalorder %s13, 2
      // Predicated region
      $region17: #{mapping_layer_forward.1} parent=5 // pred_check
        %p177 = pneg %p176
      $region18: #{mapping_layer_forward.1} parent=5 // pred_check_branch
        %179 = sbr.rel (%p177) target = $region20
      $region19: #{mapping_layer_forward.1} parent=5 // pred_region
        // Predicated region
        $region21: #{mapping_layer_forward.1} parent=19 // pred_check
          %p180 = pneg %p82
        $region22: #{mapping_layer_forward.1} parent=19 // pred_check_branch
          %182 = sbr.rel (%p180) target = $region24
        $region23: #{mapping_layer_forward.1} parent=19 // pred_region
          %s183 = sand.u32 %s13, 1
          %s184 = scalar_lea.sflag [#allocation5], %s183
          %s185 = sand.u32 %s72, 1
          %s186 = smul.addr %s185, 512
          %s187 = scalar_lea.vmem [#allocation4], %s186
          %s188 = smul.u32 32, %s22
          %s189 = smul.u32 4, %s21
          %s191 = ssub.s32 8192, 8192
          %192 = vsyncadd %s184, %s191
          %s193 = smul.addr %s188, 8
          %s194 = sadd.s32 %s189, %s193
          %s195 = smul.addr %s194, 64
          %s196 = scalar_lea.hbm %s1, %s195
          %s197 = sshll.u32 %s187, 4
          %s198 = int_to_ptr.vmem [resolvable:$true] %s197
          %203 = dma.hbm_to_vmem [thread:$0]  %s196, 8192, %s198, %s184, 512, 256, 16
        $region24: #{mapping_layer_forward.1} parent=19 // pred_fallthru
          _
        // Predicated region
        $region25: #{mapping_layer_forward.1} parent=19 // pred_check
          %p204 = pneg %p108
        $region26: #{mapping_layer_forward.1} parent=19 // pred_check_branch
          %206 = sbr.rel (%p204) target = $region28
        $region27: #{mapping_layer_forward.1} parent=19 // pred_region
          %s207 = sand.u32 %s13, 1
          %s208 = scalar_lea.sflag [#allocation5], %s207
          %s209 = sand.u32 %s98, 1
          %s210 = smul.addr %s209, 4
          %s211 = scalar_lea.vmem [#allocation6], %s210
          %s212 = smul.u32 4, %s21
          %s214 = ssub.s32 64, 64
          %215 = vsyncadd %s208, %s214
          %s216 = smul.addr %s212, 16
          %s217 = scalar_lea.hbm %s2, %s216
          %s219 = sshll.u32 %s211, 4
          %s220 = int_to_ptr.vmem [resolvable:$true] %s219
          %222 = dma.hbm_to_vmem [thread:$0]  %s217, 64, %s220, %s208
        $region28: #{mapping_layer_forward.1} parent=19 // pred_fallthru
          _
      $region20: #{mapping_layer_forward.1} parent=5 // pred_fallthru
        _
      %p223 = scmp.le.s32.totalorder 1, %s13
      %p224 = scmp.lt.s32.totalorder %s13, 3
      %p225 = pnand %p223, %p224
      %p226 = pneg %p225
      // Predicated region
      $region29: #{mapping_layer_forward.1} parent=5 // pred_check
        _
      $region30: #{mapping_layer_forward.1} parent=5 // pred_check_branch
        %228 = sbr.rel (%p225) target = $region32
      $region31: #{mapping_layer_forward.1} parent=5 // pred_region
        %s229 = ssub.s32 %s13, 1
        // Predicated region
        $region33: #{mapping_layer_forward.1} parent=31 // pred_check
          %p230 = pneg %p60
        $region34: #{mapping_layer_forward.1} parent=31 // pred_check_branch
          %232 = sbr.rel (%p230) target = $region36
        $region35: #{mapping_layer_forward.1} parent=31 // pred_region
          %233 = dma.done [#allocation3], 256
        $region36: #{mapping_layer_forward.1} parent=31 // pred_fallthru
          _
        %s234 = sand.u32 %s18, 1
        %s235 = scalar_lea.sflag [#allocation5], %s234
        %s236 = sand.u32 %s75, 1
        %s237 = smul.addr %s236, 512
        %s238 = scalar_lea.vmem [#allocation4], %s237
        // Predicated region
        $region37: #{mapping_layer_forward.1} parent=31 // pred_check
          %p239 = pneg %p88
        $region38: #{mapping_layer_forward.1} parent=31 // pred_check_branch
          %241 = sbr.rel (%p239) target = $region40
        $region39: #{mapping_layer_forward.1} parent=31 // pred_region
          %242 = dma.done %s235, 8192
        $region40: #{mapping_layer_forward.1} parent=31 // pred_fallthru
          _
        %s243 = sand.u32 %s18, 1
        %s244 = scalar_lea.sflag [#allocation5], %s243
        %s245 = sand.u32 %s101, 1
        %s246 = smul.addr %s245, 4
        %s247 = scalar_lea.vmem [#allocation6], %s246
        // Predicated region
        $region41: #{mapping_layer_forward.1} parent=31 // pred_check
          %p248 = pneg %p114
        $region42: #{mapping_layer_forward.1} parent=31 // pred_check_branch
          %250 = sbr.rel (%p248) target = $region44
        $region43: #{mapping_layer_forward.1} parent=31 // pred_region
          %251 = dma.done %s244, 64
        $region44: #{mapping_layer_forward.1} parent=31 // pred_fallthru
          _
        %p252 = pneg %p60
        %p253 = pneg %p57
        %s254 = sand.u32 %s18, 1
        %s255 = scalar_lea.sflag [#allocation5], %s254
        %s256 = sand.u32 %s75, 1
        %s257 = smul.addr %s256, 512
        %s258 = scalar_lea.vmem [#allocation4], %s257
        %p259 = pneg %p88
        %p260 = pneg %p85
        %s261 = sand.u32 %s18, 1
        %s262 = scalar_lea.sflag [#allocation5], %s261
        %s263 = sand.u32 %s101, 1
        %s264 = smul.addr %s263, 4
        %s265 = scalar_lea.vmem [#allocation6], %s264
        %p266 = pneg %p114
        %p267 = pneg %p111
        %p268 = pneg %p142
        %p269 = pneg %p139
        %s270 = sand.u32 %s129, 1
        %s271 = sand.u32 %s129, 1
        %s272 = smul.addr %s271, 64
        %s273 = scalar_lea.vmem [#allocation7], %s272
        %s274 = smul.u32 2, %s23
        %s275 = smul.u32 2, %s25
        %s276 = smul.u32 32, %s25
        %s277 = smul.u32 4, %s24
        %s278 = smul.u32 4, %s24
        %s279 = smul.u32 2, %s23
        %s280 = smul.u32 4, %s24
        %v281 = vld [vmem:[#allocation2] sm:$0xff]
        %v282 = vld [vmem:[#allocation2 + $0x8] sm:$0xff]
        %v283 = vld [vmem:[%s238] sm:$0xff]
        %v284 = vld [vmem:[%s238 + $0x8] sm:$0xff]
        %v285 = vld [vmem:[%s238 + $0x10] sm:$0xff]
        %v286 = vld [vmem:[%s238 + $0x18] sm:$0xff]
        %v287 = vld [vmem:[%s238 + $0x20] sm:$0xff]
        %v288 = vld [vmem:[%s238 + $0x28] sm:$0xff]
        %v289 = vld [vmem:[%s238 + $0x30] sm:$0xff]
        %v290 = vld [vmem:[%s238 + $0x38] sm:$0xff]
        %v291 = vld [vmem:[%s238 + $0x40] sm:$0xff]
        %v292 = vld [vmem:[%s238 + $0x48] sm:$0xff]
        %v293 = vld [vmem:[%s238 + $0x50] sm:$0xff]
        %v294 = vld [vmem:[%s238 + $0x58] sm:$0xff]
        %v295 = vld [vmem:[%s238 + $0x60] sm:$0xff]
        %v296 = vld [vmem:[%s238 + $0x68] sm:$0xff]
        %v297 = vld [vmem:[%s238 + $0x70] sm:$0xff]
        %v298 = vld [vmem:[%s238 + $0x78] sm:$0xff]
        %v299 = vld [vmem:[%s238 + $0x80] sm:$0xff]
        %v300 = vld [vmem:[%s238 + $0x88] sm:$0xff]
        %v301 = vld [vmem:[%s238 + $0x90] sm:$0xff]
        %v302 = vld [vmem:[%s238 + $0x98] sm:$0xff]
        %v303 = vld [vmem:[%s238 + $0xa0] sm:$0xff]
        %v304 = vld [vmem:[%s238 + $0xa8] sm:$0xff]
        %v305 = vld [vmem:[%s238 + $0xb0] sm:$0xff]
        %v306 = vld [vmem:[%s238 + $0xb8] sm:$0xff]
        %v307 = vld [vmem:[%s238 + $0xc0] sm:$0xff]
        %v308 = vld [vmem:[%s238 + $0xc8] sm:$0xff]
        %v309 = vld [vmem:[%s238 + $0xd0] sm:$0xff]
        %v310 = vld [vmem:[%s238 + $0xd8] sm:$0xff]
        %v311 = vld [vmem:[%s238 + $0xe0] sm:$0xff]
        %v312 = vld [vmem:[%s238 + $0xe8] sm:$0xff]
        %v313 = vld [vmem:[%s238 + $0xf0] sm:$0xff]
        %v314 = vld [vmem:[%s238 + $0xf8] sm:$0xff]
        %v315 = vld [vmem:[%s238 + $0x100] sm:$0xff]
        %v316 = vld [vmem:[%s238 + $0x108] sm:$0xff]
        %v317 = vld [vmem:[%s238 + $0x110] sm:$0xff]
        %v318 = vld [vmem:[%s238 + $0x118] sm:$0xff]
        %v319 = vld [vmem:[%s238 + $0x120] sm:$0xff]
        %v320 = vld [vmem:[%s238 + $0x128] sm:$0xff]
        %v321 = vld [vmem:[%s238 + $0x130] sm:$0xff]
        %v322 = vld [vmem:[%s238 + $0x138] sm:$0xff]
        %v323 = vld [vmem:[%s238 + $0x140] sm:$0xff]
        %v324 = vld [vmem:[%s238 + $0x148] sm:$0xff]
        %v325 = vld [vmem:[%s238 + $0x150] sm:$0xff]
        %v326 = vld [vmem:[%s238 + $0x158] sm:$0xff]
        %v327 = vld [vmem:[%s238 + $0x160] sm:$0xff]
        %v328 = vld [vmem:[%s238 + $0x168] sm:$0xff]
        %v329 = vld [vmem:[%s238 + $0x170] sm:$0xff]
        %v330 = vld [vmem:[%s238 + $0x178] sm:$0xff]
        %v331 = vld [vmem:[%s238 + $0x180] sm:$0xff]
        %v332 = vld [vmem:[%s238 + $0x188] sm:$0xff]
        %v333 = vld [vmem:[%s238 + $0x190] sm:$0xff]
        %v334 = vld [vmem:[%s238 + $0x198] sm:$0xff]
        %v335 = vld [vmem:[%s238 + $0x1a0] sm:$0xff]
        %v336 = vld [vmem:[%s238 + $0x1a8] sm:$0xff]
        %v337 = vld [vmem:[%s238 + $0x1b0] sm:$0xff]
        %v338 = vld [vmem:[%s238 + $0x1b8] sm:$0xff]
        %v339 = vld [vmem:[%s238 + $0x1c0] sm:$0xff]
        %v340 = vld [vmem:[%s238 + $0x1c8] sm:$0xff]
        %v341 = vld [vmem:[%s238 + $0x1d0] sm:$0xff]
        %v342 = vld [vmem:[%s238 + $0x1d8] sm:$0xff]
        %v343 = vld [vmem:[%s238 + $0x1e0] sm:$0xff]
        %v344 = vld [vmem:[%s238 + $0x1e8] sm:$0xff]
        %v345 = vld [vmem:[%s238 + $0x1f0] sm:$0xff]
        %v346 = vld [vmem:[%s238 + $0x1f8] sm:$0xff]
        %v349 = vunpack.c.l.b16 %v281
        %v350 = vunpack.c.h.b16 %v281
        %v351 = vunpack.c.l.b16 %v282
        %v352 = vunpack.c.h.b16 %v282
        %v353 = vpack.c.b16 %v351, %v349
        %v354 = vpack.c.b16 %v352, %v350
        %v421 = vunpack.c.l.b16 %v283
        %v422 = vunpack.c.h.b16 %v283
        %v423 = vunpack.c.l.b16 %v284
        %v424 = vunpack.c.h.b16 %v284
        %v425 = vunpack.c.l.b16 %v285
        %v426 = vunpack.c.h.b16 %v285
        %v427 = vunpack.c.l.b16 %v286
        %v428 = vunpack.c.h.b16 %v286
        %v429 = vunpack.c.l.b16 %v287
        %v430 = vunpack.c.h.b16 %v287
        %v431 = vunpack.c.l.b16 %v288
        %v432 = vunpack.c.h.b16 %v288
        %v433 = vunpack.c.l.b16 %v289
        %v434 = vunpack.c.h.b16 %v289
        %v435 = vunpack.c.l.b16 %v290
        %v436 = vunpack.c.h.b16 %v290
        %v437 = vunpack.c.l.b16 %v291
        %v438 = vunpack.c.h.b16 %v291
        %v439 = vunpack.c.l.b16 %v292
        %v440 = vunpack.c.h.b16 %v292
        %v441 = vunpack.c.l.b16 %v293
        %v442 = vunpack.c.h.b16 %v293
        %v443 = vunpack.c.l.b16 %v294
        %v444 = vunpack.c.h.b16 %v294
        %v445 = vunpack.c.l.b16 %v295
        %v446 = vunpack.c.h.b16 %v295
        %v447 = vunpack.c.l.b16 %v296
        %v448 = vunpack.c.h.b16 %v296
        %v449 = vunpack.c.l.b16 %v297
        %v450 = vunpack.c.h.b16 %v297
        %v451 = vunpack.c.l.b16 %v298
        %v452 = vunpack.c.h.b16 %v298
        %v453 = vunpack.c.l.b16 %v299
        %v454 = vunpack.c.h.b16 %v299
        %v455 = vunpack.c.l.b16 %v300
        %v456 = vunpack.c.h.b16 %v300
        %v457 = vunpack.c.l.b16 %v301
        %v458 = vunpack.c.h.b16 %v301
        %v459 = vunpack.c.l.b16 %v302
        %v460 = vunpack.c.h.b16 %v302
        %v461 = vunpack.c.l.b16 %v303
        %v462 = vunpack.c.h.b16 %v303
        %v463 = vunpack.c.l.b16 %v304
        %v464 = vunpack.c.h.b16 %v304
        %v465 = vunpack.c.l.b16 %v305
        %v466 = vunpack.c.h.b16 %v305
        %v467 = vunpack.c.l.b16 %v306
        %v468 = vunpack.c.h.b16 %v306
        %v469 = vunpack.c.l.b16 %v307
        %v470 = vunpack.c.h.b16 %v307
        %v471 = vunpack.c.l.b16 %v308
        %v472 = vunpack.c.h.b16 %v308
        %v473 = vunpack.c.l.b16 %v309
        %v474 = vunpack.c.h.b16 %v309
        %v475 = vunpack.c.l.b16 %v310
        %v476 = vunpack.c.h.b16 %v310
        %v477 = vunpack.c.l.b16 %v311
        %v478 = vunpack.c.h.b16 %v311
        %v479 = vunpack.c.l.b16 %v312
        %v480 = vunpack.c.h.b16 %v312
        %v481 = vunpack.c.l.b16 %v313
        %v482 = vunpack.c.h.b16 %v313
        %v483 = vunpack.c.l.b16 %v314
        %v484 = vunpack.c.h.b16 %v314
        %v485 = vunpack.c.l.b16 %v315
        %v486 = vunpack.c.h.b16 %v315
        %v487 = vunpack.c.l.b16 %v316
        %v488 = vunpack.c.h.b16 %v316
        %v489 = vunpack.c.l.b16 %v317
        %v490 = vunpack.c.h.b16 %v317
        %v491 = vunpack.c.l.b16 %v318
        %v492 = vunpack.c.h.b16 %v318
        %v493 = vunpack.c.l.b16 %v319
        %v494 = vunpack.c.h.b16 %v319
        %v495 = vunpack.c.l.b16 %v320
        %v496 = vunpack.c.h.b16 %v320
        %v497 = vunpack.c.l.b16 %v321
        %v498 = vunpack.c.h.b16 %v321
        %v499 = vunpack.c.l.b16 %v322
        %v500 = vunpack.c.h.b16 %v322
        %v501 = vunpack.c.l.b16 %v323
        %v502 = vunpack.c.h.b16 %v323
        %v503 = vunpack.c.l.b16 %v324
        %v504 = vunpack.c.h.b16 %v324
        %v505 = vunpack.c.l.b16 %v325
        %v506 = vunpack.c.h.b16 %v325
        %v507 = vunpack.c.l.b16 %v326
        %v508 = vunpack.c.h.b16 %v326
        %v509 = vunpack.c.l.b16 %v327
        %v510 = vunpack.c.h.b16 %v327
        %v511 = vunpack.c.l.b16 %v328
        %v512 = vunpack.c.h.b16 %v328
        %v513 = vunpack.c.l.b16 %v329
        %v514 = vunpack.c.h.b16 %v329
        %v515 = vunpack.c.l.b16 %v330
        %v516 = vunpack.c.h.b16 %v330
        %v517 = vunpack.c.l.b16 %v331
        %v518 = vunpack.c.h.b16 %v331
        %v519 = vunpack.c.l.b16 %v332
        %v520 = vunpack.c.h.b16 %v332
        %v521 = vunpack.c.l.b16 %v333
        %v522 = vunpack.c.h.b16 %v333
        %v523 = vunpack.c.l.b16 %v334
        %v524 = vunpack.c.h.b16 %v334
        %v525 = vunpack.c.l.b16 %v335
        %v526 = vunpack.c.h.b16 %v335
        %v527 = vunpack.c.l.b16 %v336
        %v528 = vunpack.c.h.b16 %v336
        %v529 = vunpack.c.l.b16 %v337
        %v530 = vunpack.c.h.b16 %v337
        %v531 = vunpack.c.l.b16 %v338
        %v532 = vunpack.c.h.b16 %v338
        %v533 = vunpack.c.l.b16 %v339
        %v534 = vunpack.c.h.b16 %v339
        %v535 = vunpack.c.l.b16 %v340
        %v536 = vunpack.c.h.b16 %v340
        %v537 = vunpack.c.l.b16 %v341
        %v538 = vunpack.c.h.b16 %v341
        %v539 = vunpack.c.l.b16 %v342
        %v540 = vunpack.c.h.b16 %v342
        %v541 = vunpack.c.l.b16 %v343
        %v542 = vunpack.c.h.b16 %v343
        %v543 = vunpack.c.l.b16 %v344
        %v544 = vunpack.c.h.b16 %v344
        %v545 = vunpack.c.l.b16 %v345
        %v546 = vunpack.c.h.b16 %v345
        %v547 = vunpack.c.l.b16 %v346
        %v548 = vunpack.c.h.b16 %v346
        %v549 = vpack.c.b16 %v425, %v421
        %v550 = vpack.c.b16 %v426, %v422
        %v551 = vpack.c.b16 %v427, %v423
        %v552 = vpack.c.b16 %v428, %v424
        %v553 = vpack.c.b16 %v433, %v429
        %v554 = vpack.c.b16 %v434, %v430
        %v555 = vpack.c.b16 %v435, %v431
        %v556 = vpack.c.b16 %v436, %v432
        %v557 = vpack.c.b16 %v441, %v437
        %v558 = vpack.c.b16 %v442, %v438
        %v559 = vpack.c.b16 %v443, %v439
        %v560 = vpack.c.b16 %v444, %v440
        %v561 = vpack.c.b16 %v449, %v445
        %v562 = vpack.c.b16 %v450, %v446
        %v563 = vpack.c.b16 %v451, %v447
        %v564 = vpack.c.b16 %v452, %v448
        %v565 = vpack.c.b16 %v457, %v453
        %v566 = vpack.c.b16 %v458, %v454
        %v567 = vpack.c.b16 %v459, %v455
        %v568 = vpack.c.b16 %v460, %v456
        %v569 = vpack.c.b16 %v465, %v461
        %v570 = vpack.c.b16 %v466, %v462
        %v571 = vpack.c.b16 %v467, %v463
        %v572 = vpack.c.b16 %v468, %v464
        %v573 = vpack.c.b16 %v473, %v469
        %v574 = vpack.c.b16 %v474, %v470
        %v575 = vpack.c.b16 %v475, %v471
        %v576 = vpack.c.b16 %v476, %v472
        %v577 = vpack.c.b16 %v481, %v477
        %v578 = vpack.c.b16 %v482, %v478
        %v579 = vpack.c.b16 %v483, %v479
        %v580 = vpack.c.b16 %v484, %v480
        %v581 = vpack.c.b16 %v489, %v485
        %v582 = vpack.c.b16 %v490, %v486
        %v583 = vpack.c.b16 %v491, %v487
        %v584 = vpack.c.b16 %v492, %v488
        %v585 = vpack.c.b16 %v497, %v493
        %v586 = vpack.c.b16 %v498, %v494
        %v587 = vpack.c.b16 %v499, %v495
        %v588 = vpack.c.b16 %v500, %v496
        %v589 = vpack.c.b16 %v505, %v501
        %v590 = vpack.c.b16 %v506, %v502
        %v591 = vpack.c.b16 %v507, %v503
        %v592 = vpack.c.b16 %v508, %v504
        %v593 = vpack.c.b16 %v513, %v509
        %v594 = vpack.c.b16 %v514, %v510
        %v595 = vpack.c.b16 %v515, %v511
        %v596 = vpack.c.b16 %v516, %v512
        %v597 = vpack.c.b16 %v521, %v517
        %v598 = vpack.c.b16 %v522, %v518
        %v599 = vpack.c.b16 %v523, %v519
        %v600 = vpack.c.b16 %v524, %v520
        %v601 = vpack.c.b16 %v529, %v525
        %v602 = vpack.c.b16 %v530, %v526
        %v603 = vpack.c.b16 %v531, %v527
        %v604 = vpack.c.b16 %v532, %v528
        %v605 = vpack.c.b16 %v537, %v533
        %v606 = vpack.c.b16 %v538, %v534
        %v607 = vpack.c.b16 %v539, %v535
        %v608 = vpack.c.b16 %v540, %v536
        %v609 = vpack.c.b16 %v545, %v541
        %v610 = vpack.c.b16 %v546, %v542
        %v611 = vpack.c.b16 %v547, %v543
        %v612 = vpack.c.b16 %v548, %v544
        %677 = vmatprep.subr.bf16.mxu0 %v578
        %678 = vmatpush1.bf16.msra.mxu0 %v577
        %679 = vmatprep.subr.bf16.mxu0 %v574
        %680 = vmatpush1.bf16.msra.mxu0 %v573
        %681 = vmatprep.subr.bf16.mxu0 %v570
        %682 = vmatpush1.bf16.msra.mxu0 %v569
        %683 = vmatprep.subr.bf16.mxu0 %v566
        %684 = vmatpush1.bf16.msra.mxu0 %v565
        %685 = vmatprep.subr.bf16.mxu0 %v562
        %686 = vmatpush1.bf16.msra.mxu0 %v561
        %687 = vmatprep.subr.bf16.mxu0 %v558
        %688 = vmatpush1.bf16.msra.mxu0 %v557
        %689 = vmatprep.subr.bf16.mxu0 %v554
        %690 = vmatpush1.bf16.msra.mxu0 %v553
        %691 = vmatprep.subr.bf16.mxu0 %v550
        %692 = vmatpush1.bf16.msra.mxu0 %v549
        %693 = vmatprep.subr.bf16.mxu0 %v610
        %694 = vmatpush2.bf16.msra.mxu0 %v609
        %695 = vmatprep.subr.bf16.mxu0 %v606
        %696 = vmatpush2.bf16.msra.mxu0 %v605
        %697 = vmatprep.subr.bf16.mxu0 %v602
        %698 = vmatpush2.bf16.msra.mxu0 %v601
        %699 = vmatprep.subr.bf16.mxu0 %v598
        %700 = vmatpush2.bf16.msra.mxu0 %v597
        %701 = vmatprep.subr.bf16.mxu0 %v594
        %702 = vmatpush2.bf16.msra.mxu0 %v593
        %703 = vmatprep.subr.bf16.mxu0 %v590
        %704 = vmatpush2.bf16.msra.mxu0 %v589
        %705 = vmatprep.subr.bf16.mxu0 %v586
        %706 = vmatpush2.bf16.msra.mxu0 %v585
        %707 = vmatprep.subr.bf16.mxu0 %v582
        %708 = vmatpush2.bf16.msra.mxu0 %v581
        %709 = vmatprep.mubr.bf16.mxu0 %v354
        %710 = vmatmul.mubr.bf16.gmra.mxu0 %v353
        %v711 = vpop.f32.mrf.mxu0
        %v712 = vadd.f32 0.0, %v711
        %v713 = vpop.f32.mrf.mxu0
        %v714 = vadd.f32 0.0, %v713
        %v715 = vpop.f32.mrf.mxu0
        %v716 = vadd.f32 0.0, %v715
        %v717 = vpop.f32.mrf.mxu0
        %v718 = vadd.f32 0.0, %v717
        %719 = vdwg.mxu0
        %720 = vmatprep.subr.bf16.mxu0 %v580
        %721 = vmatpush1.bf16.msra.mxu0 %v579
        %722 = vmatprep.subr.bf16.mxu0 %v576
        %723 = vmatpush1.bf16.msra.mxu0 %v575
        %724 = vmatprep.subr.bf16.mxu0 %v572
        %725 = vmatpush1.bf16.msra.mxu0 %v571
        %726 = vmatprep.subr.bf16.mxu0 %v568
        %727 = vmatpush1.bf16.msra.mxu0 %v567
        %728 = vmatprep.subr.bf16.mxu0 %v564
        %729 = vmatpush1.bf16.msra.mxu0 %v563
        %730 = vmatprep.subr.bf16.mxu0 %v560
        %731 = vmatpush1.bf16.msra.mxu0 %v559
        %732 = vmatprep.subr.bf16.mxu0 %v556
        %733 = vmatpush1.bf16.msra.mxu0 %v555
        %734 = vmatprep.subr.bf16.mxu0 %v552
        %735 = vmatpush1.bf16.msra.mxu0 %v551
        %736 = vmatprep.subr.bf16.mxu0 %v612
        %737 = vmatpush2.bf16.msra.mxu0 %v611
        %738 = vmatprep.subr.bf16.mxu0 %v608
        %739 = vmatpush2.bf16.msra.mxu0 %v607
        %740 = vmatprep.subr.bf16.mxu0 %v604
        %741 = vmatpush2.bf16.msra.mxu0 %v603
        %742 = vmatprep.subr.bf16.mxu0 %v600
        %743 = vmatpush2.bf16.msra.mxu0 %v599
        %744 = vmatprep.subr.bf16.mxu0 %v596
        %745 = vmatpush2.bf16.msra.mxu0 %v595
        %746 = vmatprep.subr.bf16.mxu0 %v592
        %747 = vmatpush2.bf16.msra.mxu0 %v591
        %748 = vmatprep.subr.bf16.mxu0 %v588
        %749 = vmatpush2.bf16.msra.mxu0 %v587
        %750 = vmatprep.subr.bf16.mxu0 %v584
        %751 = vmatpush2.bf16.msra.mxu0 %v583
        %752 = vmatprep.mubr.bf16.mxu0 %v354
        %753 = vmatmul.mubr.bf16.gmra.mxu0 %v353
        %v754 = vpop.f32.mrf.mxu0
        %v755 = vadd.f32 0.0, %v754
        %v756 = vpop.f32.mrf.mxu0
        %v757 = vadd.f32 0.0, %v756
        %v758 = vpop.f32.mrf.mxu0
        %v759 = vadd.f32 0.0, %v758
        %v760 = vpop.f32.mrf.mxu0
        %v761 = vadd.f32 0.0, %v760
        %762 = vdwg.mxu0
        %p763 = scmp.eq.s32.totalorder %s25, 0
        // Predicated region
        $region45: #{mapping_layer_forward.1} parent=31 // pred_check
          %p764 = pneg %p763
        $region46: #{mapping_layer_forward.1} parent=31 // pred_check_branch
          %766 = sbr.rel (%p764) target = $region48
        $region47: #{mapping_layer_forward.1} parent=31 // pred_region
          %v767 = vld [vmem:[%s247] sm:$0xf]
          %v769 = vlaneseq
          %v770 = vshrl.u32 %v769, 7
          %v771 = vsub.s32 0, %v770
          %v772 = vrot.slane %v767, %v771
          %v773 = vlaneseq
          %v774 = vshrl.u32 %v773, 7
          %v775 = vsub.s32 1, %v774
          %v776 = vrot.slane %v767, %v775
          %v777 = vlaneseq
          %v778 = vshrl.u32 %v777, 7
          %v779 = vsub.s32 2, %v778
          %v780 = vrot.slane %v767, %v779
          %v781 = vlaneseq
          %v782 = vshrl.u32 %v781, 7
          %v783 = vsub.s32 3, %v782
          %v784 = vrot.slane %v767, %v783
          %v789 = vadd.f32 %v772, %v712
          %v790 = vadd.f32 %v776, %v714
          %v791 = vadd.f32 %v780, %v755
          %v792 = vadd.f32 %v784, %v757
          %v793 = vadd.f32 %v772, %v716
          %v794 = vadd.f32 %v776, %v718
          %v795 = vadd.f32 %v780, %v759
          %v796 = vadd.f32 %v784, %v761
          %797 = vst [vmem:[%s273] sm:$0xff] %v789
          %798 = vst [vmem:[%s273 + $0x8] sm:$0xff] %v790
          %799 = vst [vmem:[%s273 + $0x10] sm:$0xff] %v791
          %800 = vst [vmem:[%s273 + $0x18] sm:$0xff] %v792
          %801 = vst [vmem:[%s273 + $0x20] sm:$0xff] %v793
          %802 = vst [vmem:[%s273 + $0x28] sm:$0xff] %v794
          %803 = vst [vmem:[%s273 + $0x30] sm:$0xff] %v795
          %804 = vst [vmem:[%s273 + $0x38] sm:$0xff] %v796
        $region48: #{mapping_layer_forward.1} parent=31 // pred_fallthru
          _
        %p805 = scmp.gt.s32.totalorder %s25, 0
        // Predicated region
        $region49: #{mapping_layer_forward.1} parent=31 // pred_check
          %p806 = pneg %p805
        $region50: #{mapping_layer_forward.1} parent=31 // pred_check_branch
          %808 = sbr.rel (%p806) target = $region52
        $region51: #{mapping_layer_forward.1} parent=31 // pred_region
          %v809 = vld [vmem:[%s273] sm:$0xff]
          %v810 = vld [vmem:[%s273 + $0x8] sm:$0xff]
          %v811 = vld [vmem:[%s273 + $0x10] sm:$0xff]
          %v812 = vld [vmem:[%s273 + $0x18] sm:$0xff]
          %v813 = vld [vmem:[%s273 + $0x20] sm:$0xff]
          %v814 = vld [vmem:[%s273 + $0x28] sm:$0xff]
          %v815 = vld [vmem:[%s273 + $0x30] sm:$0xff]
          %v816 = vld [vmem:[%s273 + $0x38] sm:$0xff]
          %v817 = vadd.f32 %v809, %v712
          %v818 = vadd.f32 %v810, %v714
          %v819 = vadd.f32 %v811, %v755
          %v820 = vadd.f32 %v812, %v757
          %v821 = vadd.f32 %v813, %v716
          %v822 = vadd.f32 %v814, %v718
          %v823 = vadd.f32 %v815, %v759
          %v824 = vadd.f32 %v816, %v761
          %825 = vst [vmem:[%s273] sm:$0xff] %v817
          %826 = vst [vmem:[%s273 + $0x8] sm:$0xff] %v818
          %827 = vst [vmem:[%s273 + $0x10] sm:$0xff] %v819
          %828 = vst [vmem:[%s273 + $0x18] sm:$0xff] %v820
          %829 = vst [vmem:[%s273 + $0x20] sm:$0xff] %v821
          %830 = vst [vmem:[%s273 + $0x28] sm:$0xff] %v822
          %831 = vst [vmem:[%s273 + $0x30] sm:$0xff] %v823
          %832 = vst [vmem:[%s273 + $0x38] sm:$0xff] %v824
        $region52: #{mapping_layer_forward.1} parent=31 // pred_fallthru
          _
        %s833 = sand.u32 %s129, 1
        %s834 = sand.u32 %s129, 1
        %s835 = smul.addr %s834, 64
        %s836 = scalar_lea.vmem [#allocation7], %s835
        // Predicated region
        $region53: #{mapping_layer_forward.1} parent=31 // pred_check
          %p837 = pneg %p139
        $region54: #{mapping_layer_forward.1} parent=31 // pred_check_branch
          %839 = sbr.rel (%p837) target = $region56
        $region55: #{mapping_layer_forward.1} parent=31 // pred_region
          %s840 = smul.u32 2, %s23
          %s841 = smul.u32 4, %s24
          %s842 = smul.addr %s840, 8
          %s843 = sadd.s32 %s841, %s842
          %s844 = smul.addr %s843, 8
          %s845 = scalar_lea.vmem %s3, %s844
          // Predicated region
          $region57: #{mapping_layer_forward.1} parent=55 // pred_check
            _
          $region58: #{mapping_layer_forward.1} parent=55 // pred_check_branch
            %847 = sbr.rel (0) target = $region60
          $region59: #{mapping_layer_forward.1} parent=55 // pred_region
            // Predicated region
            $region61: #{mapping_layer_forward.1} parent=59 // pred_check
              _
            $region62: #{mapping_layer_forward.1} parent=59 // pred_check_branch
              %849 = sbr.rel (0) target = $region64
            $region63: #{mapping_layer_forward.1} parent=59 // pred_region
              loop: start=0, step=1, limit=1
              $region65: #{mapping_layer_forward.1} parent=63 // loop_pre_header
                _
              $region66: #{mapping_layer_forward.1} parent=63 // loop_header
                %s851 = sphi 0, %s855
                %p852 = scmp.ge.s32.totalorder %s851, 1
                %s856 = sphi %s836, %s836
                %s857 = sphi %s845, %s845
              $region67: #{mapping_layer_forward.1} parent=63 // loop_header_branch
                %854 = sbr.rel (%p852) target = $region71
              $region68: #{mapping_layer_forward.1} parent=63 // loop_body
                %v858 = vld [vmem:[%s856] sm:$0xff]
                %859 = vst [vmem:[%s857] sm:$0xff] %v858
                %v860 = vld [vmem:[%s856 + $0x8] sm:$0xff]
                %861 = vst [vmem:[%s857 + $0x8] sm:$0xff] %v860
                %v862 = vld [vmem:[%s856 + $0x10] sm:$0xff]
                %863 = vst [vmem:[%s857 + $0x10] sm:$0xff] %v862
                %v864 = vld [vmem:[%s856 + $0x18] sm:$0xff]
                %865 = vst [vmem:[%s857 + $0x18] sm:$0xff] %v864
                %v866 = vld [vmem:[%s856 + $0x20] sm:$0xff]
                %867 = vst [vmem:[%s857 + $0x40] sm:$0xff] %v866
                %v868 = vld [vmem:[%s856 + $0x28] sm:$0xff]
                %869 = vst [vmem:[%s857 + $0x48] sm:$0xff] %v868
                %v870 = vld [vmem:[%s856 + $0x30] sm:$0xff]
                %871 = vst [vmem:[%s857 + $0x50] sm:$0xff] %v870
                %v872 = vld [vmem:[%s856 + $0x38] sm:$0xff]
                %873 = vst [vmem:[%s857 + $0x58] sm:$0xff] %v872
              $region69: #{mapping_layer_forward.1} parent=63 // loop_footer
                %s855 = sadd.s32 1, %s851
              $region70: #{mapping_layer_forward.1} parent=63 // loop_footer_branch
                %850 = sbr.rel target = $region66
              $region71: #{mapping_layer_forward.1} parent=63 // loop_exit
                _
            $region64: #{mapping_layer_forward.1} parent=59 // pred_fallthru
              _
            // Predicated region
            $region72: #{mapping_layer_forward.1} parent=59 // pred_check
              _
            $region73: #{mapping_layer_forward.1} parent=59 // pred_check_branch
              %875 = sbr.rel target = $region75
            $region74: #{mapping_layer_forward.1} parent=59 // pred_region
              _
            $region75: #{mapping_layer_forward.1} parent=59 // pred_fallthru
              _
          $region60: #{mapping_layer_forward.1} parent=55 // pred_fallthru
            _
          %876 = vnop
        $region56: #{mapping_layer_forward.1} parent=31 // pred_fallthru
          _
      $region32: #{mapping_layer_forward.1} parent=5 // pred_fallthru
        _
      %p877 = scmp.le.s32.totalorder 2, %s13
      // Predicated region
      $region76: #{mapping_layer_forward.1} parent=5 // pred_check
        %p878 = pneg %p877
      $region77: #{mapping_layer_forward.1} parent=5 // pred_check_branch
        %880 = sbr.rel (%p878) target = $region79
      $region78: #{mapping_layer_forward.1} parent=5 // pred_region
        %s881 = ssub.s32 %s13, 2
        // Predicated region
        $region80: #{mapping_layer_forward.1} parent=78 // pred_check
          %p882 = pneg %p145
        $region81: #{mapping_layer_forward.1} parent=78 // pred_check_branch
          %884 = sbr.rel (%p882) target = $region83
        $region82: #{mapping_layer_forward.1} parent=78 // pred_region
          %s885 = sand.u32 %s130, 1
          %s886 = sand.u32 %s130, 1
          %s887 = smul.addr %s886, 64
          %s888 = scalar_lea.vmem [#allocation7], %s887
        $region83: #{mapping_layer_forward.1} parent=78 // pred_fallthru
          _
      $region79: #{mapping_layer_forward.1} parent=5 // pred_fallthru
        _
    $region6: #{mapping_layer_forward.1} parent=1 // loop_footer
      %s17 = sadd.s32 1, %s13
    $region7: #{mapping_layer_forward.1} parent=1 // loop_footer_branch
      %12 = sbr.rel target = $region3
    $region8: #{mapping_layer_forward.1} parent=1 // loop_exit
      _
    %889 = vsyncpa [#allocation3], 1
    %s890 = scalar_lea.sflag [#allocation3], 1
    %891 = vsyncpa %s890, 1
    %892 = vsyncpa [#allocation5], 1
    %s893 = scalar_lea.sflag [#allocation5], 1
    %894 = vsyncpa %s893, 1

</llo_original>
